<compile_context>
chip_gen: v7x
topology: tpu7x:2x2x1
jax: 0.10.0
libtpu: 0.0.40
codegen_flags: <defaults>
</compile_context>

<pallas_src>
import jax
import jax.numpy as jnp
from jax.experimental import pallas as pl
from jax.experimental.pallas import tpu as pltpu

_LANES = 128


def _sublanes_for(dtype) -> int:
    # Sub-32-bit dtypes pack along sublanes: 8 for 4-byte, 16 for 2-byte, 32 for 1-byte.
    itemsize = jnp.dtype(dtype).itemsize
    return max(8, 32 // max(itemsize, 1))


def _scaling_kernel(w_ref, x_ref, o_ref):
    # w_ref: (1,) f32 scalar in SMEM; x_ref / o_ref: (block_rows, 128) VMEM tiles.
    o_ref[...] = (x_ref[...] * w_ref[0]).astype(o_ref.dtype)


def _scaling_pallas_2d(x2d, w, *, block_rows):
    rows, lanes = x2d.shape
    grid = (pl.cdiv(rows, block_rows),)
    return pl.pallas_call(
        _scaling_kernel,
        out_shape=jax.ShapeDtypeStruct((rows, lanes), x2d.dtype),
        grid_spec=pl.GridSpec(
            grid=grid,
            in_specs=[
                pl.BlockSpec(memory_space=pltpu.MemorySpace.SMEM),
                pl.BlockSpec((block_rows, lanes), lambda i: (i, 0)),
            ],
            out_specs=pl.BlockSpec((block_rows, lanes), lambda i: (i, 0)),
        ),
        compiler_params=pltpu.CompilerParams(
            dimension_semantics=("parallel",),   # shard row tiles across TCs on v7x
            vmem_limit_bytes=32 * 1024 * 1024,   # explicit budget, safe on v5e/v6e/v7x
        ),
    )(w, x2d)


def scaling_forward(x, weight, *, min_pallas_bytes=1 << 16, force_pallas=False):
    """Elementwise multiply x by a learned scalar `weight` (torch.mul(x, w))."""
    orig_shape = x.shape
    dtype = x.dtype
    n = x.size
    nbytes = n * jnp.dtype(dtype).itemsize

    # Dispatch policy: tiny tensors are pure launch/step overhead for Pallas;
    # let XLA fuse the multiply instead.
    if not force_pallas and nbytes < min_pallas_bytes:
        return (x.astype(jnp.float32) * jnp.float32(weight)).astype(dtype)

    sub = _sublanes_for(dtype)
    quantum = sub * _LANES
    pad_to = ((n + quantum - 1) // quantum) * quantum

    x_flat = jnp.ravel(x)  # free (bitcast) layout change to a lane-dense slab
    if pad_to != n:
        # Only taken when n is not a multiple of the vreg quantum
        # (dead branch for (2, 4, 16, 16) -> 2048 = 2 * 8 * 128).
        x_flat = jnp.pad(x_flat, (0, pad_to - n))
    rows = pad_to // _LANES
    x2d = x_flat.reshape(rows, _LANES)

    # Scalar weight stays f32 on the scalar path (SMEM); multiply in f32 in-kernel.
    w = jnp.asarray(weight, dtype=jnp.float32).reshape(1)

    # ~2 MiB per tile => (in + out) x 2 double buffers ~= 8 MiB scoped VMEM.
    target_tile_bytes = 2 * 1024 * 1024
    br = target_tile_bytes // (_LANES * jnp.dtype(dtype).itemsize)
    br = max(sub, (br // sub) * sub)          # keep a sublane-aligned row count
    block_rows = min(rows, br)

    out2d = _scaling_pallas_2d(x2d, w, block_rows=block_rows)

    out_flat = out2d.reshape(-1)
    if pad_to != n:
        out_flat = out_flat[:n]
    return out_flat.reshape(orig_shape)


if __name__ == "__main__":
    key = jax.random.PRNGKey(0)

    # Deterministic parameter init, mirroring scaling(init_scale=1.0).
    init_scale = 1.0
    weight = jnp.float32(init_scale)

    # Module-sized input (2, 4, 16, 16); force the Pallas path so the kernel runs.
    x = jax.random.normal(key, (2, 4, 16, 16), dtype=jnp.float32)
    out = scaling_forward(x, weight, force_pallas=True)
    jax.block_until_ready(out)
    ref = x * weight
    assert out.shape == x.shape and out.dtype == x.dtype
    assert jnp.allclose(out, ref, atol=1e-6, rtol=1e-6)

    # Default dispatch for the tiny tensor takes the fused-XLA path; verify it too.
    out_small = scaling_forward(x, weight)
    jax.block_until_ready(out_small)
    assert jnp.allclose(out_small, ref, atol=1e-6, rtol=1e-6)

    # Larger input exercises the multi-step, double-buffered tiled grid.
    x_big = jax.random.normal(jax.random.PRNGKey(1), (4, 32, 128, 128), dtype=jnp.float32)
    w_big = jnp.float32(1.7)
    out_big = scaling_forward(x_big, w_big, force_pallas=True)
    jax.block_until_ready(out_big)
    assert jnp.allclose(out_big, x_big * w_big, atol=1e-6, rtol=1e-6)

    print("KERNEL_OK")
</pallas_src>

<mosaic_0001>
module attributes {stable_mosaic.version = 11 : i64} {
  func.func @_scaling_kernel(%arg0: i32, %arg1: memref<1xf32, #tpu.memory_space<smem>>, %arg2: memref<16x128xf32, #tpu.memory_space<vmem>>, %arg3: memref<16x128xf32, #tpu.memory_space<vmem>>) attributes {dimension_semantics = [#tpu.dimension_semantics<parallel>], iteration_bounds = array<i64: 1>, scalar_prefetch = 0 : i64, scratch_operands = 0 : i64, tpu.core_type = #tpu.core_type<tc>, window_params = [{transform_indices = @transform_0, window_bounds = array<i64: 1>}, {transform_indices = @transform_1, window_bounds = array<i64: 16, 128>}, {transform_indices = @transform_2, window_bounds = array<i64: 16, 128>}]} {
    %c0 = arith.constant 0 : index
    %c0_0 = arith.constant 0 : index
    %0 = vector.load %arg2[%c0, %c0_0] : memref<16x128xf32, #tpu.memory_space<vmem>>, vector<16x128xf32>
    %c0_1 = arith.constant 0 : index
    %1 = memref.load %arg1[%c0_1] : memref<1xf32, #tpu.memory_space<smem>>
    %2 = vector.broadcast %1 : f32 to vector<16x128xf32>
    %3 = arith.mulf %0, %2 : vector<16x128xf32>
    %c0_2 = arith.constant 0 : index
    %c0_3 = arith.constant 0 : index
    %4 = vector.load %arg3[%c0_2, %c0_3] : memref<16x128xf32, #tpu.memory_space<vmem>>, vector<16x128xf32>
    tpu.vector_store %arg3[%c0_2, %c0_3], %3 {strides = array<i32>} : memref<16x128xf32, #tpu.memory_space<vmem>>, vector<16x128xf32>,
    return
  }
  func.func @transform_0(%arg0: i32) -> i32 {
    %c0_i32 = arith.constant 0 : i32
    %c0_i32_0 = arith.constant 0 : i32
    return %c0_i32 : i32
  }
  func.func @transform_1(%arg0: i32) -> (i32, i32) {
    %c0_i32 = arith.constant 0 : i32
    %c0_i32_0 = arith.constant 0 : i32
    return %arg0, %c0_i32 : i32, i32
  }
  func.func @transform_2(%arg0: i32) -> (i32, i32) {
    %c0_i32 = arith.constant 0 : i32
    %c0_i32_0 = arith.constant 0 : i32
    return %arg0, %c0_i32 : i32, i32
  }
}

</mosaic_0001>

<llo_original>
// kernel: tpu_custom_call.1
$region0: #{tpu_custom_call.1}
  #allocation0 [shape = 'u32[]', space=smem, size = 0x4, offset = 0x4, fixed_abs, tag = 'smem constant byte address 0x4 - core index']
  #allocation1 [shape = 'u32[144,128]{1,0:T(1,128)}', space=vmem, size = 0x12000, scoped, tag = 'internal scratch']
  #allocation2 [shape = 'f32[1]{0:T(128)S(6)}', space=smem, size = 0x200, scoped, tag = 'scoped memory for tpu_custom_call.1']
  %s0 = inlined_call_operand.<no memory space> [shape: f32[1], index: 0, kind: input, shape index: {}]
  %s1 = inlined_call_operand.hbm [shape: f32[16,128], index: 1, kind: input, shape index: {}]
  %s2 = inlined_call_operand.hbm [shape: f32[16,128], index: 2, kind: output, shape index: {}]
  %s3 = sld [smem:[#allocation0]]
  $region22: #{tpu_custom_call.1} parent=0
    _
  %s5 = ssub.s32 1, %s3
  %s6 = scalar_select 0, %s5, %s3
  %7 = sst [smem:[#allocation2]] %s0
  $region1: #{tpu_custom_call.1} parent=0
    #allocation3 [shape = 'u8[8192]{0}', space=vmem, size = 0x2000, scoped, tag = 'input window, operand 1, single buffered']
    #allocation4 [shape = 's32[1]{0}', space=sflag, size = 0x4, scoped, tag = 'scoped memory for tpu_custom_call.1']
    #allocation5 [shape = 's32[1]{0}', space=sflag, size = 0x4, scoped, tag = 'scoped memory for tpu_custom_call.1']
    #allocation6 [shape = 'u8[8192]{0}', space=vmem, size = 0x2000, scoped, tag = 'output window, operand 0, single buffered']
    %8 = vsyncpa [#allocation4], 0
    %9 = vsyncpa [#allocation5], 0
    // Predicated region
    $region2: #{tpu_custom_call.1} parent=1 // pred_check
      _
    $region3: #{tpu_custom_call.1} parent=1 // pred_check_branch
      %11 = sbr.rel (0) target = $region5
    $region4: #{tpu_custom_call.1} parent=1 // pred_region
      _
    $region5: #{tpu_custom_call.1} parent=1 // pred_fallthru
      _
    // Predicated region
    $region6: #{tpu_custom_call.1} parent=1 // pred_check
      _
    $region7: #{tpu_custom_call.1} parent=1 // pred_check_branch
      %13 = sbr.rel (0) target = $region9
    $region8: #{tpu_custom_call.1} parent=1 // pred_region
      %s15 = ssub.s32 256, 256
      %16 = vsyncadd [#allocation4], %s15
      %s17 = sshll.u32 [#allocation3], 4
      %s18 = int_to_ptr.vmem [resolvable:$true] %s17
      %23 = dma.hbm_to_vmem [thread:$0]  %s1, 256, %s18, [#allocation4], 128, 128, 8
    $region9: #{tpu_custom_call.1} parent=1 // pred_fallthru
      _
    // Predicated region
    $region10: #{tpu_custom_call.1} parent=1 // pred_check
      _
    $region11: #{tpu_custom_call.1} parent=1 // pred_check_branch
      %25 = sbr.rel (0) target = $region13
    $region12: #{tpu_custom_call.1} parent=1 // pred_region
      %26 = dma.done [#allocation4], 256
    $region13: #{tpu_custom_call.1} parent=1 // pred_fallthru
      _
    %v27 = vld [vmem:[#allocation3] sm:$0xff]
    %v28 = vld [vmem:[#allocation3 + $0x8] sm:$0xff]
    %s29 = sld [smem:[#allocation2]]
    %v30 = vstv %s29
    %v31 = vmul.f32 %v27, %v30
    %v32 = vmul.f32 %v28, %v30
    %33 = vst [vmem:[#allocation6] sm:$0xff] %v31
    %34 = vst [vmem:[#allocation6 + $0x8] sm:$0xff] %v32
    // Predicated region
    $region14: #{tpu_custom_call.1} parent=1 // pred_check
      _
    $region15: #{tpu_custom_call.1} parent=1 // pred_check_branch
      %36 = sbr.rel (0) target = $region17
    $region16: #{tpu_custom_call.1} parent=1 // pred_region
      %s38 = ssub.s32 256, 256
      %39 = vsyncadd [#allocation5], %s38
      %s40 = sshll.u32 [#allocation6], 4
      %s41 = int_to_ptr.vmem [resolvable:$true] %s40
      %46 = dma.vmem_to_hbm [thread:$0]  %s41, 256, %s2, [#allocation5], 128, 128, 8
    $region17: #{tpu_custom_call.1} parent=1 // pred_fallthru
      _
    // Predicated region
    $region18: #{tpu_custom_call.1} parent=1 // pred_check
      _
    $region19: #{tpu_custom_call.1} parent=1 // pred_check_branch
      %48 = sbr.rel (0) target = $region21
    $region20: #{tpu_custom_call.1} parent=1 // pred_region
      %49 = dma.done [#allocation5], 256
    $region21: #{tpu_custom_call.1} parent=1 // pred_fallthru
      _
    %50 = vsyncpa [#allocation4], 1
    %51 = vsyncpa [#allocation5], 1

</llo_original>
